<compile_context>
chip_gen: v7x
topology: tpu7x:2x2x1
jax: 0.10.0
libtpu: 0.0.40
codegen_flags: <defaults>
</compile_context>

<pallas_src>
import jax
import jax.numpy as jnp
from jax.experimental import pallas as pl
from jax.experimental.pallas import tpu as pltpu


def _cond_unet_kernel(x_ref,     # (B*C,     T_HW)  VMEM  fused batch/channel slab
                      wx_ref,    # (B*C_out, B*C)   VMEM  block-diag kron(I_B, W_x)
                      wctx_ref,  # (B*C_out, B*NC)  VMEM  block-diag kron(I_B, W_ctx)
                      lab_ref,   # (1,       B*NC)  VMEM  flattened class labels
                      aux_ref,   # (B*C_out, 3)     VMEM  [bias | tproj | t] columns
                      o_ref):    # (B*C_out, T_HW)  VMEM
    # --- conditioning vector (the module's own compute, algebraically folded) ---
    # cond[b*C_out + o] = sum_m W_ctx[o, m] * labels[b, m]
    # (elementwise mul + XLU lane reduction on a single vreg; no degenerate matmul)
    cond = jnp.sum(wctx_ref[...] * lab_ref[...], axis=-1, keepdims=True)

    aux = aux_ref[...]
    bias_v = aux[:, 0:1]                      # (B*C_out, 1)
    tproj_v = aux[:, 1:2]                     # (B*C_out, 1)
    t_v = aux[:, 2:3]                         # (B*C_out, 1)  per-batch timestep
    cond = cond + bias_v + t_v * tproj_v      # stays vreg-resident, (B*C_out, 1)

    # --- stand-in model: 1x1 conv over channels, per batch via block-diag W ---
    out = jnp.dot(wx_ref[...], x_ref[...],
                  preferred_element_type=jnp.float32)       # (B*C_out, T_HW)

    # implicit VPU broadcast of the (B*C_out, 1) conditioning over the lane axis
    o_ref[...] = (out + cond).astype(o_ref.dtype)


def _pick_hw_tile(hw, max_tile=2048):
    """Largest lane tile (multiple of 128, divisor of hw) <= max_tile; or hw."""
    if hw <= max_tile:
        return hw
    t = max_tile - (max_tile % 128)
    while t >= 128:
        if hw % t == 0:
            return t
        t -= 128
    return hw


def input_conditioned_unet(x, t, class_labels, w, bias, tproj):
    """x: (B,C,H,W) f32; t: (B,) int32; class_labels: (B,NC) f32.
    w: (C_out, C+NC); bias, tproj: (C_out, 1)."""
    B, C, H, W = x.shape
    NC = class_labels.shape[1]
    C_out = w.shape[0]
    HW = H * W
    T_HW = _pick_hw_tile(HW)

    f32 = jnp.float32

    # --- pure layout plumbing (no arithmetic moved out of the kernel) ---
    x2d = x.reshape(B * C, HW)                                     # fused batch slab
    eye_b = jnp.eye(B, dtype=w.dtype)
    wx_bd = jnp.kron(eye_b, w[:, :C])                              # (B*C_out, B*C)
    wctx_bd = jnp.kron(eye_b, w[:, C:])                            # (B*C_out, B*NC)
    lab_row = class_labels.reshape(1, B * NC).astype(f32)          # (1, B*NC)
    bias_rep = jnp.tile(bias.reshape(C_out), (B,))                 # (B*C_out,)
    tproj_rep = jnp.tile(tproj.reshape(C_out), (B,))               # (B*C_out,)
    t_rep = jnp.repeat(t.astype(f32), C_out)                       # (B*C_out,)
    aux = jnp.stack([bias_rep, tproj_rep, t_rep], axis=1)          # (B*C_out, 3)

    grid = (HW // T_HW,)

    out2d = pl.pallas_call(
        _cond_unet_kernel,
        out_shape=jax.ShapeDtypeStruct((B * C_out, HW), x.dtype),
        grid=grid,
        in_specs=[
            pl.BlockSpec((B * C, T_HW), lambda h: (0, h)),        # x slab (streamed)
            pl.BlockSpec((B * C_out, B * C), lambda h: (0, 0)),   # resident
            pl.BlockSpec((B * C_out, B * NC), lambda h: (0, 0)),  # resident
            pl.BlockSpec((1, B * NC), lambda h: (0, 0)),          # resident
            pl.BlockSpec((B * C_out, 3), lambda h: (0, 0)),       # resident
        ],
        out_specs=pl.BlockSpec((B * C_out, T_HW), lambda h: (0, h)),
        compiler_params=pltpu.CompilerParams(
            dimension_semantics=("parallel",)),
    )(x2d, wx_bd, wctx_bd, lab_row, aux)

    return out2d.reshape(B, C_out, H, W)


if __name__ == "__main__":
    B, C, H, W = 2, 4, 16, 16
    NC = 4                      # number of conditioning channels (class labels)
    C_out = 4                   # stand-in model output channels
    C_in = C + NC

    key = jax.random.PRNGKey(0)
    kx, kl, kw, kb, kt = jax.random.split(key, 5)

    x = jax.random.normal(kx, (B, C, H, W), dtype=jnp.float32)
    class_labels = jax.random.normal(kl, (B, NC), dtype=jnp.float32)
    t = jnp.array([10, 500], dtype=jnp.int32)

    # Deterministic synthetic parameters for the stand-in inner model.
    w = jax.random.normal(kw, (C_out, C_in), dtype=jnp.float32) * 0.1
    bias = jax.random.normal(kb, (C_out, 1), dtype=jnp.float32) * 0.1
    tproj = jax.random.normal(kt, (C_out, 1), dtype=jnp.float32) * 0.01

    out = jax.block_until_ready(
        input_conditioned_unet(x, t, class_labels, w, bias, tproj))

    # Pure-JAX reference of the same semantics (broadcast + concat + stand-in model).
    ctx_ref = jnp.broadcast_to(class_labels.reshape(B, NC, 1, 1), (B, NC, H, W))
    net_ref = jnp.concatenate([x, ctx_ref], axis=1)           # (B, C_in, H, W)
    ref = (jnp.einsum('oc,bchw->bohw', w, net_ref)
           + bias.reshape(1, C_out, 1, 1)
           + t.astype(jnp.float32).reshape(B, 1, 1, 1) * tproj.reshape(1, C_out, 1, 1))

    assert out.shape == (B, C_out, H, W)
    assert jnp.allclose(out, ref, atol=1e-4, rtol=1e-4)
    print("KERNEL_OK")
</pallas_src>

<mosaic_0001>
module attributes {stable_mosaic.version = 11 : i64} {
  func.func @_cond_unet_kernel(%arg0: i32, %arg1: memref<8x256xf32, #tpu.memory_space<vmem>>, %arg2: memref<8x8xf32, #tpu.memory_space<vmem>>, %arg3: memref<8x8xf32, #tpu.memory_space<vmem>>, %arg4: memref<1x8xf32, #tpu.memory_space<vmem>>, %arg5: memref<8x3xf32, #tpu.memory_space<vmem>>, %arg6: memref<8x256xf32, #tpu.memory_space<vmem>>) attributes {dimension_semantics = [#tpu.dimension_semantics<parallel>], iteration_bounds = array<i64: 1>, scalar_prefetch = 0 : i64, scratch_operands = 0 : i64, tpu.core_type = #tpu.core_type<tc>, window_params = [{transform_indices = @transform_0, window_bounds = array<i64: 8, 256>}, {pipeline_mode = #tpu.pipeline_mode<synchronous>, transform_indices = @transform_1, window_bounds = array<i64: 8, 8>}, {pipeline_mode = #tpu.pipeline_mode<synchronous>, transform_indices = @transform_2, window_bounds = array<i64: 8, 8>}, {pipeline_mode = #tpu.pipeline_mode<synchronous>, transform_indices = @transform_3, window_bounds = array<i64: 1, 8>}, {pipeline_mode = #tpu.pipeline_mode<synchronous>, transform_indices = @transform_4, window_bounds = array<i64: 8, 3>}, {transform_indices = @transform_5, window_bounds = array<i64: 8, 256>}]} {
    %c0 = arith.constant 0 : index
    %c0_0 = arith.constant 0 : index
    %0 = vector.load %arg3[%c0, %c0_0] : memref<8x8xf32, #tpu.memory_space<vmem>>, vector<8x8xf32>
    %c0_1 = arith.constant 0 : index
    %c0_2 = arith.constant 0 : index
    %1 = vector.load %arg4[%c0_1, %c0_2] : memref<1x8xf32, #tpu.memory_space<vmem>>, vector<1x8xf32>
    %2 = vector.broadcast %1 : vector<1x8xf32> to vector<8x8xf32>
    %3 = arith.mulf %0, %2 : vector<8x8xf32>
    %cst = arith.constant dense<0.000000e+00> : vector<8xf32>
    %4 = vector.multi_reduction <add>, %3, %cst [1] : vector<8x8xf32> to vector<8xf32>
    %5 = vector.shape_cast %4 : vector<8xf32> to vector<8x1xf32>
    %c0_3 = arith.constant 0 : index
    %c0_4 = arith.constant 0 : index
    %6 = vector.load %arg5[%c0_3, %c0_4] : memref<8x3xf32, #tpu.memory_space<vmem>>, vector<8x3xf32>
    %7 = vector.extract_strided_slice %6 {offsets = [0, 0], sizes = [8, 1], strides = [1, 1]} : vector<8x3xf32> to vector<8x1xf32>
    %8 = vector.extract_strided_slice %6 {offsets = [0, 1], sizes = [8, 1], strides = [1, 1]} : vector<8x3xf32> to vector<8x1xf32>
    %9 = vector.extract_strided_slice %6 {offsets = [0, 2], sizes = [8, 1], strides = [1, 1]} : vector<8x3xf32> to vector<8x1xf32>
    %10 = arith.addf %5, %7 : vector<8x1xf32>
    %11 = arith.mulf %9, %8 : vector<8x1xf32>
    %12 = arith.addf %10, %11 : vector<8x1xf32>
    %c0_5 = arith.constant 0 : index
    %c0_6 = arith.constant 0 : index
    %13 = vector.load %arg2[%c0_5, %c0_6] : memref<8x8xf32, #tpu.memory_space<vmem>>, vector<8x8xf32>
    %c0_7 = arith.constant 0 : index
    %c0_8 = arith.constant 0 : index
    %14 = vector.load %arg1[%c0_7, %c0_8] : memref<8x256xf32, #tpu.memory_space<vmem>>, vector<8x256xf32>
    %cst_9 = arith.constant dense<0.000000e+00> : vector<8x256xf32>
    %15 = tpu.matmul %13, %14, %cst_9 {dimension_numbers = #tpu.dot_dimension_numbers<[1], [0], [0], [1], [0, 0, 1, 1], [], []>} : vector<8x8xf32>, vector<8x256xf32>, vector<8x256xf32> -> vector<8x256xf32>
    %16 = vector.broadcast %12 : vector<8x1xf32> to vector<8x256xf32>
    %17 = arith.addf %15, %16 : vector<8x256xf32>
    %c0_10 = arith.constant 0 : index
    %c0_11 = arith.constant 0 : index
    %18 = vector.load %arg6[%c0_10, %c0_11] : memref<8x256xf32, #tpu.memory_space<vmem>>, vector<8x256xf32>
    tpu.vector_store %arg6[%c0_10, %c0_11], %17 {strides = array<i32>} : memref<8x256xf32, #tpu.memory_space<vmem>>, vector<8x256xf32>,
    return
  }
  func.func @transform_0(%arg0: i32) -> (i32, i32) {
    %c0_i32 = arith.constant 0 : i32
    %c0_i32_0 = arith.constant 0 : i32
    return %c0_i32, %arg0 : i32, i32
  }
  func.func @transform_1(%arg0: i32) -> (i32, i32) {
    %c0_i32 = arith.constant 0 : i32
    %c0_i32_0 = arith.constant 0 : i32
    %c0_i32_1 = arith.constant 0 : i32
    return %c0_i32, %c0_i32_0 : i32, i32
  }
  func.func @transform_2(%arg0: i32) -> (i32, i32) {
    %c0_i32 = arith.constant 0 : i32
    %c0_i32_0 = arith.constant 0 : i32
    %c0_i32_1 = arith.constant 0 : i32
    return %c0_i32, %c0_i32_0 : i32, i32
  }
  func.func @transform_3(%arg0: i32) -> (i32, i32) {
    %c0_i32 = arith.constant 0 : i32
    %c0_i32_0 = arith.constant 0 : i32
    %c0_i32_1 = arith.constant 0 : i32
    return %c0_i32, %c0_i32_0 : i32, i32
  }
  func.func @transform_4(%arg0: i32) -> (i32, i32) {
    %c0_i32 = arith.constant 0 : i32
    %c0_i32_0 = arith.constant 0 : i32
    %c0_i32_1 = arith.constant 0 : i32
    return %c0_i32, %c0_i32_0 : i32, i32
  }
  func.func @transform_5(%arg0: i32) -> (i32, i32) {
    %c0_i32 = arith.constant 0 : i32
    %c0_i32_0 = arith.constant 0 : i32
    return %c0_i32, %arg0 : i32, i32
  }
}

</mosaic_0001>

<llo_original>
// kernel: tpu_custom_call.1
$region0: #{tpu_custom_call.1}
  #allocation0 [shape = 'u32[]', space=smem, size = 0x4, offset = 0x4, fixed_abs, tag = 'smem constant byte address 0x4 - core index']
  #allocation1 [shape = 'u32[144,128]{1,0:T(1,128)}', space=vmem, size = 0x12000, scoped, tag = 'internal scratch']
  %s0 = inlined_call_operand.hbm [shape: f32[8,256], index: 0, kind: input, shape index: {}]
  %s1 = inlined_call_operand.vmem [shape: f32[8,8], index: 1, kind: input, shape index: {}]
  %s2 = inlined_call_operand.vmem [shape: f32[8,8], index: 2, kind: input, shape index: {}]
  %s3 = inlined_call_operand.vmem [shape: f32[1,8], index: 3, kind: input, shape index: {}]
  %s4 = inlined_call_operand.vmem [shape: f32[8,3], index: 4, kind: input, shape index: {}]
  %s5 = inlined_call_operand.hbm [shape: f32[8,256], index: 5, kind: output, shape index: {}]
  %s6 = sld [smem:[#allocation0]]
  $region34: #{tpu_custom_call.1} parent=0
    _
  %s8 = ssub.s32 1, %s6
  %s9 = scalar_select 0, %s8, %s6
  $region1: #{tpu_custom_call.1} parent=0
    #allocation2 [shape = 'u8[8192]{0}', space=vmem, size = 0x2000, scoped, tag = 'input window, operand 0, single buffered']
    #allocation3 [shape = 's32[1]{0}', space=sflag, size = 0x4, scoped, tag = 'scoped memory for tpu_custom_call.1']
    #allocation4 [shape = 's32[1]{0}', space=sflag, size = 0x4, scoped, tag = 'scoped memory for tpu_custom_call.1']
    #allocation5 [shape = 'u8[8192]{0}', space=vmem, size = 0x2000, scoped, tag = 'output window, operand 0, single buffered']
    %10 = vsyncpa [#allocation3], 0
    %11 = vsyncpa [#allocation4], 0
    // Predicated region
    $region2: #{tpu_custom_call.1} parent=1 // pred_check
      _
    $region3: #{tpu_custom_call.1} parent=1 // pred_check_branch
      %13 = sbr.rel (0) target = $region5
    $region4: #{tpu_custom_call.1} parent=1 // pred_region
      %s15 = ssub.s32 256, 256
      %16 = vsyncadd [#allocation3], %s15
      %s18 = sshll.u32 [#allocation2], 4
      %s19 = int_to_ptr.vmem [resolvable:$true] %s18
      %21 = dma.hbm_to_vmem [thread:$0]  %s0, 256, %s19, [#allocation3]
    $region5: #{tpu_custom_call.1} parent=1 // pred_fallthru
      _
    // Predicated region
    $region6: #{tpu_custom_call.1} parent=1 // pred_check
      _
    $region7: #{tpu_custom_call.1} parent=1 // pred_check_branch
      %23 = sbr.rel (0) target = $region9
    $region8: #{tpu_custom_call.1} parent=1 // pred_region
      _
    $region9: #{tpu_custom_call.1} parent=1 // pred_fallthru
      _
    // Predicated region
    $region10: #{tpu_custom_call.1} parent=1 // pred_check
      _
    $region11: #{tpu_custom_call.1} parent=1 // pred_check_branch
      %25 = sbr.rel (0) target = $region13
    $region12: #{tpu_custom_call.1} parent=1 // pred_region
      _
    $region13: #{tpu_custom_call.1} parent=1 // pred_fallthru
      _
    // Predicated region
    $region14: #{tpu_custom_call.1} parent=1 // pred_check
      _
    $region15: #{tpu_custom_call.1} parent=1 // pred_check_branch
      %27 = sbr.rel (0) target = $region17
    $region16: #{tpu_custom_call.1} parent=1 // pred_region
      _
    $region17: #{tpu_custom_call.1} parent=1 // pred_fallthru
      _
    // Predicated region
    $region18: #{tpu_custom_call.1} parent=1 // pred_check
      _
    $region19: #{tpu_custom_call.1} parent=1 // pred_check_branch
      %29 = sbr.rel (0) target = $region21
    $region20: #{tpu_custom_call.1} parent=1 // pred_region
      _
    $region21: #{tpu_custom_call.1} parent=1 // pred_fallthru
      _
    // Predicated region
    $region22: #{tpu_custom_call.1} parent=1 // pred_check
      _
    $region23: #{tpu_custom_call.1} parent=1 // pred_check_branch
      %31 = sbr.rel (0) target = $region25
    $region24: #{tpu_custom_call.1} parent=1 // pred_region
      %32 = dma.done [#allocation3], 256
    $region25: #{tpu_custom_call.1} parent=1 // pred_fallthru
      _
    %v33 = vld [vmem:[%s2] sm:$0xff]
    %v34 = vld [vmem:[%s3] sm:$0x1]
    %v36 = vlaneseq
    %v37 = vshrl.u32 %v36, 7
    %v38 = vsub.s32 0, %v37
    %v39 = vrot.slane %v34, %v38
    %v41 = vmul.f32 %v33, %v39
    %vm42 = vcmask 64512
    %v43 = vsel %vm42, %v41, 0.0
    %44 = vadd.xlane.f32.xlu0 %v43
    %v45 = vpop.xlane.xlu0 %44
    %v46 = vld [vmem:[%s4] sm:$0xff]
    %v47 = vadd.f32 %v45, %v46
    %49 = vrot.lane.b32.xlu0 %v46, 1
    %v50 = vpop.permute.xlu0 %49
    %v52 = vmul.f32 %v46, %v50
    %54 = vrot.lane.b32.xlu0 %v52, 126
    %v55 = vpop.permute.xlu0 %54
    %v57 = vadd.f32 %v47, %v55
    %v58 = vld [vmem:[%s1] sm:$0xff]
    %v59 = vld [vmem:[#allocation2] sm:$0xff]
    %v60 = vld [vmem:[#allocation2 + $0x8] sm:$0xff]
    %62 = vset.pattern.permute.xlu0 0
    %63 = vperm.xlu0 %62, %v57
    %v64 = vpop.permute.xlu0 %63
    %v67 = vsel %vm42, %v58, 0
    %69 = vmatprep.subr.mxu0 %v60
    %70 = vmatpush1.msra.mxu0 %v59
    %71 = vmatprep.subr.mxu0 0.0
    %72 = vmatpush1.msra.mxu0 0.0
    %73 = vmatprep.subr.mxu0 0.0
    %74 = vmatpush1.msra.mxu0 0.0
    %75 = vmatprep.subr.mxu0 0.0
    %76 = vmatpush1.msra.mxu0 0.0
    %77 = vmatprep.subr.mxu0 0.0
    %78 = vmatpush1.msra.mxu0 0.0
    %79 = vmatprep.subr.mxu0 0.0
    %80 = vmatpush1.msra.mxu0 0.0
    %81 = vmatprep.subr.mxu0 0.0
    %82 = vmatpush1.msra.mxu0 0.0
    %83 = vmatprep.subr.mxu0 0.0
    %84 = vmatpush1.msra.mxu0 0.0
    %85 = vmatprep.subr.mxu0 0.0
    %86 = vmatpush1.msra.mxu0 0.0
    %87 = vmatprep.subr.mxu0 0.0
    %88 = vmatpush1.msra.mxu0 0.0
    %89 = vmatprep.subr.mxu0 0.0
    %90 = vmatpush1.msra.mxu0 0.0
    %91 = vmatprep.subr.mxu0 0.0
    %92 = vmatpush1.msra.mxu0 0.0
    %93 = vmatprep.subr.mxu0 0.0
    %94 = vmatpush1.msra.mxu0 0.0
    %95 = vmatprep.subr.mxu0 0.0
    %96 = vmatpush1.msra.mxu0 0.0
    %97 = vmatprep.subr.mxu0 0.0
    %98 = vmatpush1.msra.mxu0 0.0
    %99 = vmatprep.subr.mxu0 0.0
    %100 = vmatpush1.msra.mxu0 0.0
    %101 = vmatprep.subr.mxu0 0.0
    %102 = vmatpush1.msra.mxu0 0.0
    %103 = vmatprep.subr.mxu0 0.0
    %104 = vmatpush1.msra.mxu0 0.0
    %105 = vmatprep.subr.mxu0 0.0
    %106 = vmatpush1.msra.mxu0 0.0
    %107 = vmatprep.subr.mxu0 0.0
    %108 = vmatpush1.msra.mxu0 0.0
    %109 = vmatprep.subr.mxu0 0.0
    %110 = vmatpush1.msra.mxu0 0.0
    %111 = vmatprep.subr.mxu0 0.0
    %112 = vmatpush1.msra.mxu0 0.0
    %113 = vmatprep.subr.mxu0 0.0
    %114 = vmatpush1.msra.mxu0 0.0
    %115 = vmatprep.subr.mxu0 0.0
    %116 = vmatpush1.msra.mxu0 0.0
    %117 = vmatprep.subr.mxu0 0.0
    %118 = vmatpush1.msra.mxu0 0.0
    %119 = vmatprep.subr.mxu0 0.0
    %120 = vmatpush1.msra.mxu0 0.0
    %121 = vmatprep.subr.mxu0 0.0
    %122 = vmatpush1.msra.mxu0 0.0
    %123 = vmatprep.subr.mxu0 0.0
    %124 = vmatpush1.msra.mxu0 0.0
    %125 = vmatprep.subr.mxu0 0.0
    %126 = vmatpush1.msra.mxu0 0.0
    %127 = vmatprep.subr.mxu0 0.0
    %128 = vmatpush1.msra.mxu0 0.0
    %129 = vmatprep.subr.mxu0 0.0
    %130 = vmatpush1.msra.mxu0 0.0
    %131 = vmatprep.subr.mxu0 0.0
    %132 = vmatpush1.msra.mxu0 0.0
    %133 = vmatprep.mubr.f32.mxu0 0.0
    %134 = vmatmul.mubr.f32.gmra.mrb[0].mxu0 %v67
    %v135 = vpop.f32.mrb[0].mxu0
    %v136 = vadd.f32 %v64, %v135
    %v137 = vpop.f32.mrb[0].mxu0
    %v138 = vadd.f32 %v64, %v137
    %139 = vdwg.mxu0
    %140 = vst [vmem:[#allocation5] sm:$0xff] %v136
    %141 = vst [vmem:[#allocation5 + $0x8] sm:$0xff] %v138
    // Predicated region
    $region26: #{tpu_custom_call.1} parent=1 // pred_check
      _
    $region27: #{tpu_custom_call.1} parent=1 // pred_check_branch
      %143 = sbr.rel (0) target = $region29
    $region28: #{tpu_custom_call.1} parent=1 // pred_region
      %s145 = ssub.s32 256, 256
      %146 = vsyncadd [#allocation4], %s145
      %s148 = sshll.u32 [#allocation5], 4
      %s149 = int_to_ptr.vmem [resolvable:$true] %s148
      %151 = dma.vmem_to_hbm [thread:$0]  %s149, 256, %s5, [#allocation4]
    $region29: #{tpu_custom_call.1} parent=1 // pred_fallthru
      _
    // Predicated region
    $region30: #{tpu_custom_call.1} parent=1 // pred_check
      _
    $region31: #{tpu_custom_call.1} parent=1 // pred_check_branch
      %153 = sbr.rel (0) target = $region33
    $region32: #{tpu_custom_call.1} parent=1 // pred_region
      %154 = dma.done [#allocation4], 256
    $region33: #{tpu_custom_call.1} parent=1 // pred_fallthru
      _
    %155 = vsyncpa [#allocation3], 1
    %156 = vsyncpa [#allocation4], 1

</llo_original>
